<compile_context>
chip_gen: v7x
topology: tpu7x:2x2x1
jax: 0.10.0
libtpu: 0.0.40
codegen_flags: <defaults>
</compile_context>

<pallas_src>
import functools

import jax
import jax.numpy as jnp
from jax.experimental import pallas as pl
from jax.experimental.pallas import tpu as pltpu


def _basic_conv_kernel(x_ref, w_ref, b_ref, o_ref, *, W, KH, KW, pad, compute_dtype):
    # x_ref: (NB, Cin, H*W)         NCHW images, spatial flattened onto the lane axis
    # w_ref: (Cout, KH*KW*Cin)      BN-scale-folded weights (compute_dtype)
    # b_ref: (Cout, 1)              folded BN bias (f32)
    # o_ref: (NB, Cout, H*W)        lane-dense output (H*W multiple of 128 -> unmasked vst)
    NB, Cin, L = x_ref.shape
    cdt = compute_dtype
    P = pad * W + pad  # flat zero-extension; absorbs the kh ("row") part of the halo

    # Zero-extended flat slabs (value-level, lives in vregs).
    if P > 0:
        zpad = jnp.zeros((Cin, P), cdt)
        slabs = [jnp.concatenate([zpad, x_ref[n].astype(cdt), zpad], axis=1)
                 for n in range(NB)]                      # each (Cin, L + 2P)
    else:
        slabs = [x_ref[n].astype(cdt) for n in range(NB)]

    # Column-validity masks (only the kw shift can wrap across image rows); hoisted
    # out of the tap loop so each distinct dw is built exactly once.
    col = jax.lax.broadcasted_iota(jnp.int32, (1, NB * L), 1) % W
    col_mask = {}
    for kw in range(KW):
        dw = kw - pad
        if dw != 0 and dw not in col_mask:
            valid = (col + dw >= 0) & (col + dw < W)
            col_mask[dw] = jnp.where(valid, 1.0, 0.0).astype(cdt)

    # im2col rows, (kh, kw)-major / cin-minor -> (K, NB*L).  Shifts are static lane
    # slices of the slab (XLU relayout), not strided-window reshapes.
    rows = []
    for kh in range(KH):
        for kw in range(KW):
            start = kh * W + kw              # == P + (kh - pad) * W + (kw - pad)
            pieces = [s[:, start:start + L] for s in slabs]
            tap = pieces[0] if NB == 1 else jnp.concatenate(pieces, axis=1)
            dw = kw - pad
            if dw != 0:
                tap = tap * col_mask[dw]
            rows.append(tap)
    patches = jnp.concatenate(rows, axis=0)  # (KH*KW*Cin, NB*L)

    # Single MXU matmul over all taps (K = KH*KW*Cin), f32 accumulation,
    # fused folded-BN bias + ReLU, lane-dense stores.
    y = jnp.dot(w_ref[...], patches, preferred_element_type=jnp.float32)
    y = jnp.maximum(y + b_ref[...], 0.0)     # (Cout, NB*L)
    for n in range(NB):
        o_ref[n] = y[:, n * L:(n + 1) * L].astype(o_ref.dtype)


def _pick_images_per_step(n, lanes_per_image, max_lanes=4096):
    """Largest divisor of n (<=8) keeping the matmul lane dim within a sane budget."""
    for d in range(min(n, 8), 0, -1):
        if n % d == 0 and d * lanes_per_image <= max_lanes:
            return d
    return 1


@functools.partial(jax.jit, static_argnames=("padding", "compute_dtype"))
def basic_conv(x_nchw, weight_oihw, gamma, beta, running_mean, running_var,
               *, padding=1, eps=1e-5, compute_dtype=jnp.float32):
    """Forward of BasicConv. x_nchw: (N, Cin, H, W). Returns (N, Cout, H, W)."""
    N, Cin, H, W = x_nchw.shape
    Cout, Cin_w, KH, KW = weight_oihw.shape
    if Cin_w != Cin:
        raise NotImplementedError("groups != 1 is not supported")
    if 2 * padding != KH - 1 or 2 * padding != KW - 1:
        raise NotImplementedError("only 'same' convs (2*padding == kernel_size-1) supported")
    L = H * W
    K = KH * KW * Cin

    # BN (eval) folding: scale goes into the weights, bias stays as a (Cout, 1) add.
    scale = gamma / jnp.sqrt(running_var + eps)                          # (Cout,)
    bias = (beta - running_mean * scale).reshape(Cout, 1).astype(jnp.float32)
    # (Cout, Cin, KH, KW) -> (Cout, KH, KW, Cin) -> (Cout, K); row = (kh*KW+kw)*Cin + ci
    w_mat = (jnp.transpose(weight_oihw, (0, 2, 3, 1)).reshape(Cout, K)
             * scale[:, None]).astype(compute_dtype)

    # Free row-major reshape: spatial dims collapsed onto the lane axis (no pad/transpose).
    x_flat = x_nchw.reshape(N, Cin, L)

    NB = _pick_images_per_step(N, L)
    kernel = functools.partial(_basic_conv_kernel, W=W, KH=KH, KW=KW,
                               pad=padding, compute_dtype=compute_dtype)

    out_flat = pl.pallas_call(
        kernel,
        out_shape=jax.ShapeDtypeStruct((N, Cout, L), x_nchw.dtype),
        grid_spec=pltpu.PrefetchScalarGridSpec(
            num_scalar_prefetch=0,
            grid=(N // NB,),
            in_specs=[
                pl.BlockSpec((NB, Cin, L), lambda i: (i, 0, 0)),
                pl.BlockSpec((Cout, K), lambda i: (0, 0)),
                pl.BlockSpec((Cout, 1), lambda i: (0, 0)),
            ],
            out_specs=pl.BlockSpec((NB, Cout, L), lambda i: (i, 0, 0)),
        ),
        compiler_params=pltpu.CompilerParams(
            dimension_semantics=("parallel",)),
    )(x_flat, w_mat, bias)

    return out_flat.reshape(N, Cout, H, W)   # free reshape back to NCHW


def _reference(x_nchw, weight_oihw, gamma, beta, running_mean, running_var,
               *, padding=1, eps=1e-5):
    """Pure-JAX reference (lax conv + BN(eval) + ReLU) for validation."""
    y = jax.lax.conv_general_dilated(
        x_nchw, weight_oihw, window_strides=(1, 1),
        padding=[(padding, padding), (padding, padding)],
        dimension_numbers=("NCHW", "OIHW", "NCHW"))
    scale = (gamma / jnp.sqrt(running_var + eps)).reshape(1, -1, 1, 1)
    bias = (beta - running_mean * gamma / jnp.sqrt(running_var + eps)).reshape(1, -1, 1, 1)
    return jnp.maximum(y * scale + bias, 0.0)


if __name__ == "__main__":
    key = jax.random.PRNGKey(0)
    k_x, k_w, k_g, k_b, k_m, k_v = jax.random.split(key, 6)

    # BasicConv(in_planes=4, out_planes=8, kernel_size=3, padding=1)
    N, Cin, H, W = 2, 4, 16, 16
    Cout, KH, KW = 8, 3, 3
    padding = 1

    x = jax.random.normal(k_x, (N, Cin, H, W), jnp.float32)
    weight = jax.random.normal(k_w, (Cout, Cin, KH, KW), jnp.float32) * 0.1
    gamma = 1.0 + 0.1 * jax.random.normal(k_g, (Cout,), jnp.float32)
    beta = 0.1 * jax.random.normal(k_b, (Cout,), jnp.float32)
    running_mean = 0.1 * jax.random.normal(k_m, (Cout,), jnp.float32)
    running_var = 1.0 + 0.2 * jax.random.uniform(k_v, (Cout,), jnp.float32)

    ref = _reference(x, weight, gamma, beta, running_mean, running_var,
                     padding=padding)

    # f32 compute path (tight match to the reference).
    out = basic_conv(x, weight, gamma, beta, running_mean, running_var,
                     padding=padding)
    out = jax.block_until_ready(out)
    assert out.shape == (N, Cout, H, W), out.shape
    assert jnp.allclose(out, ref, atol=1e-4, rtol=1e-4), float(
        jnp.max(jnp.abs(out - ref)))

    # bf16 compute path (bf16 operands, f32 MXU accumulation) — relaxed tolerance.
    out_bf16 = basic_conv(x, weight, gamma, beta, running_mean, running_var,
                          padding=padding, compute_dtype=jnp.bfloat16)
    out_bf16 = jax.block_until_ready(out_bf16)
    assert out_bf16.shape == (N, Cout, H, W), out_bf16.shape
    assert jnp.allclose(out_bf16, ref, atol=5e-2, rtol=5e-2), float(
        jnp.max(jnp.abs(out_bf16 - ref)))

    print("KERNEL_OK")
</pallas_src>

<mosaic_0001>
module attributes {stable_mosaic.version = 11 : i64} {
  func.func @_basic_conv_kernel(%arg0: i32, %arg1: memref<2x4x256xf32, #tpu.memory_space<vmem>>, %arg2: memref<8x36xf32, #tpu.memory_space<vmem>>, %arg3: memref<8x1xf32, #tpu.memory_space<vmem>>, %arg4: memref<2x8x256xf32, #tpu.memory_space<vmem>>) attributes {dimension_semantics = [#tpu.dimension_semantics<parallel>], iteration_bounds = array<i64: 1>, scalar_prefetch = 0 : i64, scratch_operands = 0 : i64, tpu.core_type = #tpu.core_type<tc>, window_params = [{transform_indices = @transform_0, window_bounds = array<i64: 2, 4, 256>}, {pipeline_mode = #tpu.pipeline_mode<synchronous>, transform_indices = @transform_1, window_bounds = array<i64: 8, 36>}, {pipeline_mode = #tpu.pipeline_mode<synchronous>, transform_indices = @transform_2, window_bounds = array<i64: 8, 1>}, {transform_indices = @transform_3, window_bounds = array<i64: 2, 8, 256>}]} {
    %cst = arith.constant 0.000000e+00 : f32
    %0 = vector.broadcast %cst : f32 to vector<4x17xf32>
    %c0 = arith.constant 0 : index
    %c0_0 = arith.constant 0 : index
    %c0_1 = arith.constant 0 : index
    %1 = vector.load %arg1[%c0, %c0_0, %c0_1] : memref<2x4x256xf32, #tpu.memory_space<vmem>>, vector<1x4x256xf32>
    %2 = vector.shape_cast %1 : vector<1x4x256xf32> to vector<4x256xf32>
    %3 = tpu.concatenate %0, %2, %0 in 1 : vector<4x17xf32>, vector<4x256xf32>, vector<4x17xf32> -> vector<4x290xf32>
    %c1 = arith.constant 1 : index
    %c0_2 = arith.constant 0 : index
    %c0_3 = arith.constant 0 : index
    %4 = vector.load %arg1[%c1, %c0_2, %c0_3] : memref<2x4x256xf32, #tpu.memory_space<vmem>>, vector<1x4x256xf32>
    %5 = vector.shape_cast %4 : vector<1x4x256xf32> to vector<4x256xf32>
    %6 = tpu.concatenate %0, %5, %0 in 1 : vector<4x17xf32>, vector<4x256xf32>, vector<4x17xf32> -> vector<4x290xf32>
    %7 = tpu.iota {dimensions = array<i32: 1>} : vector<1x512xi32>
    %c16_i32 = arith.constant 16 : i32
    %c0_i32 = arith.constant 0 : i32
    %8 = arith.cmpi eq, %c16_i32, %c0_i32 : i32
    %c1_i32 = arith.constant 1 : i32
    %9 = arith.select %8, %c1_i32, %c16_i32 : i32
    %10 = vector.broadcast %9 : i32 to vector<1x512xi32>
    %11 = arith.remsi %7, %10 : vector<1x512xi32>
    %c0_i32_4 = arith.constant 0 : i32
    %12 = vector.broadcast %c0_i32_4 : i32 to vector<1x512xi32>
    %13 = arith.cmpi ne, %11, %12 : vector<1x512xi32>
    %c0_i32_5 = arith.constant 0 : i32
    %14 = vector.broadcast %c0_i32_5 : i32 to vector<1x512xi32>
    %15 = arith.cmpi slt, %11, %14 : vector<1x512xi32>
    %c0_i32_6 = arith.constant 0 : i32
    %16 = arith.cmpi slt, %9, %c0_i32_6 : i32
    %17 = vector.broadcast %16 : i1 to vector<1x512xi1>
    %18 = vector.broadcast %17 : vector<1x512xi1> to vector<1x512xi1>
    %19 = arith.xori %15, %18 : vector<1x512xi1>
    %20 = arith.andi %19, %13 : vector<1x512xi1>
    %21 = vector.broadcast %9 : i32 to vector<1x512xi32>
    %22 = arith.addi %11, %21 : vector<1x512xi32>
    %23 = arith.select %20, %22, %11 : vector<1x512xi1>, vector<1x512xi32>
    %c-1_i32 = arith.constant -1 : i32
    %24 = vector.broadcast %c-1_i32 : i32 to vector<1x512xi32>
    %25 = arith.addi %23, %24 : vector<1x512xi32>
    %c0_i32_7 = arith.constant 0 : i32
    %26 = vector.broadcast %c0_i32_7 : i32 to vector<1x512xi32>
    %27 = arith.cmpi sge, %25, %26 : vector<1x512xi32>
    %c-1_i32_8 = arith.constant -1 : i32
    %28 = vector.broadcast %c-1_i32_8 : i32 to vector<1x512xi32>
    %29 = arith.addi %23, %28 : vector<1x512xi32>
    %c16_i32_9 = arith.constant 16 : i32
    %30 = vector.broadcast %c16_i32_9 : i32 to vector<1x512xi32>
    %31 = arith.cmpi slt, %29, %30 : vector<1x512xi32>
    %32 = arith.andi %27, %31 : vector<1x512xi1>
    %cst_10 = arith.constant 1.000000e+00 : f32
    %cst_11 = arith.constant 0.000000e+00 : f32
    %33 = vector.broadcast %cst_10 : f32 to vector<1x512xf32>
    %34 = vector.broadcast %cst_11 : f32 to vector<1x512xf32>
    %35 = arith.select %32, %33, %34 : vector<1x512xi1>, vector<1x512xf32>
    %c1_i32_12 = arith.constant 1 : i32
    %36 = vector.broadcast %c1_i32_12 : i32 to vector<1x512xi32>
    %37 = arith.addi %23, %36 : vector<1x512xi32>
    %c0_i32_13 = arith.constant 0 : i32
    %38 = vector.broadcast %c0_i32_13 : i32 to vector<1x512xi32>
    %39 = arith.cmpi sge, %37, %38 : vector<1x512xi32>
    %c1_i32_14 = arith.constant 1 : i32
    %40 = vector.broadcast %c1_i32_14 : i32 to vector<1x512xi32>
    %41 = arith.addi %23, %40 : vector<1x512xi32>
    %c16_i32_15 = arith.constant 16 : i32
    %42 = vector.broadcast %c16_i32_15 : i32 to vector<1x512xi32>
    %43 = arith.cmpi slt, %41, %42 : vector<1x512xi32>
    %44 = arith.andi %39, %43 : vector<1x512xi1>
    %cst_16 = arith.constant 1.000000e+00 : f32
    %cst_17 = arith.constant 0.000000e+00 : f32
    %45 = vector.broadcast %cst_16 : f32 to vector<1x512xf32>
    %46 = vector.broadcast %cst_17 : f32 to vector<1x512xf32>
    %47 = arith.select %44, %45, %46 : vector<1x512xi1>, vector<1x512xf32>
    %48 = vector.extract_strided_slice %3 {offsets = [0, 0], sizes = [4, 256], strides = [1, 1]} : vector<4x290xf32> to vector<4x256xf32>
    %49 = vector.extract_strided_slice %6 {offsets = [0, 0], sizes = [4, 256], strides = [1, 1]} : vector<4x290xf32> to vector<4x256xf32>
    %50 = tpu.concatenate %48, %49 in 1 : vector<4x256xf32>, vector<4x256xf32> -> vector<4x512xf32>
    %51 = vector.broadcast %35 : vector<1x512xf32> to vector<4x512xf32>
    %52 = arith.mulf %50, %51 : vector<4x512xf32>
    %53 = vector.extract_strided_slice %3 {offsets = [0, 1], sizes = [4, 256], strides = [1, 1]} : vector<4x290xf32> to vector<4x256xf32>
    %54 = vector.extract_strided_slice %6 {offsets = [0, 1], sizes = [4, 256], strides = [1, 1]} : vector<4x290xf32> to vector<4x256xf32>
    %55 = tpu.concatenate %53, %54 in 1 : vector<4x256xf32>, vector<4x256xf32> -> vector<4x512xf32>
    %56 = vector.extract_strided_slice %3 {offsets = [0, 2], sizes = [4, 256], strides = [1, 1]} : vector<4x290xf32> to vector<4x256xf32>
    %57 = vector.extract_strided_slice %6 {offsets = [0, 2], sizes = [4, 256], strides = [1, 1]} : vector<4x290xf32> to vector<4x256xf32>
    %58 = tpu.concatenate %56, %57 in 1 : vector<4x256xf32>, vector<4x256xf32> -> vector<4x512xf32>
    %59 = vector.broadcast %47 : vector<1x512xf32> to vector<4x512xf32>
    %60 = arith.mulf %58, %59 : vector<4x512xf32>
    %61 = vector.extract_strided_slice %3 {offsets = [0, 16], sizes = [4, 256], strides = [1, 1]} : vector<4x290xf32> to vector<4x256xf32>
    %62 = vector.extract_strided_slice %6 {offsets = [0, 16], sizes = [4, 256], strides = [1, 1]} : vector<4x290xf32> to vector<4x256xf32>
    %63 = tpu.concatenate %61, %62 in 1 : vector<4x256xf32>, vector<4x256xf32> -> vector<4x512xf32>
    %64 = vector.broadcast %35 : vector<1x512xf32> to vector<4x512xf32>
    %65 = arith.mulf %63, %64 : vector<4x512xf32>
    %66 = vector.extract_strided_slice %3 {offsets = [0, 17], sizes = [4, 256], strides = [1, 1]} : vector<4x290xf32> to vector<4x256xf32>
    %67 = vector.extract_strided_slice %6 {offsets = [0, 17], sizes = [4, 256], strides = [1, 1]} : vector<4x290xf32> to vector<4x256xf32>
    %68 = tpu.concatenate %66, %67 in 1 : vector<4x256xf32>, vector<4x256xf32> -> vector<4x512xf32>
    %69 = vector.extract_strided_slice %3 {offsets = [0, 18], sizes = [4, 256], strides = [1, 1]} : vector<4x290xf32> to vector<4x256xf32>
    %70 = vector.extract_strided_slice %6 {offsets = [0, 18], sizes = [4, 256], strides = [1, 1]} : vector<4x290xf32> to vector<4x256xf32>
    %71 = tpu.concatenate %69, %70 in 1 : vector<4x256xf32>, vector<4x256xf32> -> vector<4x512xf32>
    %72 = vector.broadcast %47 : vector<1x512xf32> to vector<4x512xf32>
    %73 = arith.mulf %71, %72 : vector<4x512xf32>
    %74 = vector.extract_strided_slice %3 {offsets = [0, 32], sizes = [4, 256], strides = [1, 1]} : vector<4x290xf32> to vector<4x256xf32>
    %75 = vector.extract_strided_slice %6 {offsets = [0, 32], sizes = [4, 256], strides = [1, 1]} : vector<4x290xf32> to vector<4x256xf32>
    %76 = tpu.concatenate %74, %75 in 1 : vector<4x256xf32>, vector<4x256xf32> -> vector<4x512xf32>
    %77 = vector.broadcast %35 : vector<1x512xf32> to vector<4x512xf32>
    %78 = arith.mulf %76, %77 : vector<4x512xf32>
    %79 = vector.extract_strided_slice %3 {offsets = [0, 33], sizes = [4, 256], strides = [1, 1]} : vector<4x290xf32> to vector<4x256xf32>
    %80 = vector.extract_strided_slice %6 {offsets = [0, 33], sizes = [4, 256], strides = [1, 1]} : vector<4x290xf32> to vector<4x256xf32>
    %81 = tpu.concatenate %79, %80 in 1 : vector<4x256xf32>, vector<4x256xf32> -> vector<4x512xf32>
    %82 = vector.extract_strided_slice %3 {offsets = [0, 34], sizes = [4, 256], strides = [1, 1]} : vector<4x290xf32> to vector<4x256xf32>
    %83 = vector.extract_strided_slice %6 {offsets = [0, 34], sizes = [4, 256], strides = [1, 1]} : vector<4x290xf32> to vector<4x256xf32>
    %84 = tpu.concatenate %82, %83 in 1 : vector<4x256xf32>, vector<4x256xf32> -> vector<4x512xf32>
    %85 = vector.broadcast %47 : vector<1x512xf32> to vector<4x512xf32>
    %86 = arith.mulf %84, %85 : vector<4x512xf32>
    %87 = tpu.concatenate %52, %55, %60, %65, %68, %73, %78, %81, %86 in 0 : vector<4x512xf32>, vector<4x512xf32>, vector<4x512xf32>, vector<4x512xf32>, vector<4x512xf32>, vector<4x512xf32>, vector<4x512xf32>, vector<4x512xf32>, vector<4x512xf32> -> vector<36x512xf32>
    %c0_18 = arith.constant 0 : index
    %c0_19 = arith.constant 0 : index
    %88 = vector.load %arg2[%c0_18, %c0_19] : memref<8x36xf32, #tpu.memory_space<vmem>>, vector<8x36xf32>
    %cst_20 = arith.constant dense<0.000000e+00> : vector<8x512xf32>
    %89 = tpu.matmul %88, %87, %cst_20 {dimension_numbers = #tpu.dot_dimension_numbers<[1], [0], [0], [1], [0, 0, 1, 1], [], []>} : vector<8x36xf32>, vector<36x512xf32>, vector<8x512xf32> -> vector<8x512xf32>
    %c0_21 = arith.constant 0 : index
    %c0_22 = arith.constant 0 : index
    %90 = vector.load %arg3[%c0_21, %c0_22] : memref<8x1xf32, #tpu.memory_space<vmem>>, vector<8x1xf32>
    %91 = vector.broadcast %90 : vector<8x1xf32> to vector<8x512xf32>
    %92 = arith.addf %89, %91 : vector<8x512xf32>
    %cst_23 = arith.constant 0.000000e+00 : f32
    %93 = vector.broadcast %cst_23 : f32 to vector<8x512xf32>
    %94 = arith.maximumf %92, %93 : vector<8x512xf32>
    %95 = vector.extract_strided_slice %94 {offsets = [0, 0], sizes = [8, 256], strides = [1, 1]} : vector<8x512xf32> to vector<8x256xf32>
    %c0_24 = arith.constant 0 : index
    %c0_25 = arith.constant 0 : index
    %c0_26 = arith.constant 0 : index
    %96 = vector.load %arg4[%c0_24, %c0_25, %c0_26] : memref<2x8x256xf32, #tpu.memory_space<vmem>>, vector<1x8x256xf32>
    %97 = vector.shape_cast %96 : vector<1x8x256xf32> to vector<8x256xf32>
    %98 = vector.shape_cast %95 : vector<8x256xf32> to vector<1x8x256xf32>
    tpu.vector_store %arg4[%c0_24, %c0_25, %c0_26], %98 {strides = array<i32>} : memref<2x8x256xf32, #tpu.memory_space<vmem>>, vector<1x8x256xf32>,
    %99 = vector.extract_strided_slice %94 {offsets = [0, 256], sizes = [8, 256], strides = [1, 1]} : vector<8x512xf32> to vector<8x256xf32>
    %c1_27 = arith.constant 1 : index
    %c0_28 = arith.constant 0 : index
    %c0_29 = arith.constant 0 : index
    %100 = vector.load %arg4[%c1_27, %c0_28, %c0_29] : memref<2x8x256xf32, #tpu.memory_space<vmem>>, vector<1x8x256xf32>
    %101 = vector.shape_cast %100 : vector<1x8x256xf32> to vector<8x256xf32>
    %102 = vector.shape_cast %99 : vector<8x256xf32> to vector<1x8x256xf32>
    tpu.vector_store %arg4[%c1_27, %c0_28, %c0_29], %102 {strides = array<i32>} : memref<2x8x256xf32, #tpu.memory_space<vmem>>, vector<1x8x256xf32>,
    return
  }
  func.func @transform_0(%arg0: i32) -> (i32, i32, i32) {
    %c0_i32 = arith.constant 0 : i32
    %c0_i32_0 = arith.constant 0 : i32
    %c0_i32_1 = arith.constant 0 : i32
    return %arg0, %c0_i32, %c0_i32_0 : i32, i32, i32
  }
  func.func @transform_1(%arg0: i32) -> (i32, i32) {
    %c0_i32 = arith.constant 0 : i32
    %c0_i32_0 = arith.constant 0 : i32
    %c0_i32_1 = arith.constant 0 : i32
    return %c0_i32, %c0_i32_0 : i32, i32
  }
  func.func @transform_2(%arg0: i32) -> (i32, i32) {
    %c0_i32 = arith.constant 0 : i32
    %c0_i32_0 = arith.constant 0 : i32
    %c0_i32_1 = arith.constant 0 : i32
    return %c0_i32, %c0_i32_0 : i32, i32
  }
  func.func @transform_3(%arg0: i32) -> (i32, i32, i32) {
    %c0_i32 = arith.constant 0 : i32
    %c0_i32_0 = arith.constant 0 : i32
    %c0_i32_1 = arith.constant 0 : i32
    return %arg0, %c0_i32, %c0_i32_0 : i32, i32, i32
  }
}

</mosaic_0001>

<llo_original>
// kernel: basic_conv.1
$region0: #{basic_conv.1}
  #allocation0 [shape = 'u32[]', space=smem, size = 0x4, offset = 0x4, fixed_abs, tag = 'smem constant byte address 0x4 - core index']
  #allocation1 [shape = 'u32[144,128]{1,0:T(1,128)}', space=vmem, size = 0x12000, scoped, tag = 'internal scratch']
  %s0 = inlined_call_operand.vmem [shape: f32[2,4,256], index: 0, kind: input, shape index: {}]
  %s1 = inlined_call_operand.vmem [shape: f32[8,36], index: 1, kind: input, shape index: {}]
  %s2 = inlined_call_operand.vmem [shape: f32[8,1], index: 2, kind: input, shape index: {}]
  %s3 = inlined_call_operand.vmem [shape: f32[2,8,256], index: 3, kind: output, shape index: {}]
  %s4 = sld [smem:[#allocation0]]
  $region22: #{basic_conv.1} parent=0
    _
  %s6 = ssub.s32 1, %s4
  %s7 = scalar_select 0, %s6, %s4
  // Predicated region
  $region2: #{basic_conv.1} parent=0 // pred_check
    _
  $region3: #{basic_conv.1} parent=0 // pred_check_branch
    %9 = sbr.rel (0) target = $region5
  $region4: #{basic_conv.1} parent=0 // pred_region
    _
  $region5: #{basic_conv.1} parent=0 // pred_fallthru
    _
  // Predicated region
  $region6: #{basic_conv.1} parent=0 // pred_check
    _
  $region7: #{basic_conv.1} parent=0 // pred_check_branch
    %11 = sbr.rel (0) target = $region9
  $region8: #{basic_conv.1} parent=0 // pred_region
    _
  $region9: #{basic_conv.1} parent=0 // pred_fallthru
    _
  // Predicated region
  $region10: #{basic_conv.1} parent=0 // pred_check
    _
  $region11: #{basic_conv.1} parent=0 // pred_check_branch
    %13 = sbr.rel (0) target = $region13
  $region12: #{basic_conv.1} parent=0 // pred_region
    _
  $region13: #{basic_conv.1} parent=0 // pred_fallthru
    _
  %v14 = vld [vmem:[%s0] sm:$0xff]
  %v16 = vcombine.high %v14, %v14
  %17 = vrot.lane.b32.xlu0 %v14, 17
  %v18 = vpop.permute.xlu0 %17
  %19 = vrot.lane.b32.xlu0 %v16, 17
  %v20 = vpop.permute.xlu0 %19
  %vm21 = vcmask 138240
  %v22 = vsel %vm21, %v18, %v20
  %v26 = vsel %vm21, 0.0, %v18
  %v27 = vsel %vm21, %v20, 0.0
  %s28 = scalar_lea.vmem %s0, 8
  %v29 = vld [vmem:[%s28] sm:$0xff]
  %v31 = vcombine.high %v29, %v29
  %32 = vrot.lane.b32.xlu0 %v29, 17
  %v33 = vpop.permute.xlu0 %32
  %34 = vrot.lane.b32.xlu0 %v31, 17
  %v35 = vpop.permute.xlu0 %34
  %v36 = vsel %vm21, %v33, %v35
  %v40 = vsel %vm21, 0.0, %v33
  %v41 = vsel %vm21, %v35, 0.0
  %v42 = vlaneseq
  %v43 = vand.u32 %v42, 127
  %v44 = vadd.s32 %v43, 128
  %v45 = vadd.s32 %v43, 256
  %v46 = vadd.s32 %v43, 384
  %vm47 = vcmp.lt.s32.totalorder %v43, 0
  %v48 = vsub.s32 0, %v43
  %v49 = vsel %vm47, %v48, %v43
  %v50 = vshrl.u32 %v49, 4
  %v51 = vand.u32 %v49, 15
  %v52 = vsub.s32 0, %v51
  %v53 = vsel %vm47, %v52, %v51
  %vm54 = vcmp.lt.s32.totalorder %v44, 0
  %v55 = vsub.s32 0, %v44
  %v56 = vsel %vm54, %v55, %v44
  %v57 = vshrl.u32 %v56, 4
  %v58 = vand.u32 %v56, 15
  %v59 = vsub.s32 0, %v58
  %v60 = vsel %vm54, %v59, %v58
  %vm61 = vcmp.lt.s32.totalorder %v45, 0
  %v62 = vsub.s32 0, %v45
  %v63 = vsel %vm61, %v62, %v45
  %v64 = vshrl.u32 %v63, 4
  %v65 = vand.u32 %v63, 15
  %v66 = vsub.s32 0, %v65
  %v67 = vsel %vm61, %v66, %v65
  %vm68 = vcmp.lt.s32.totalorder %v46, 0
  %v69 = vsub.s32 0, %v46
  %v70 = vsel %vm68, %v69, %v46
  %v71 = vshrl.u32 %v70, 4
  %v72 = vand.u32 %v70, 15
  %v73 = vsub.s32 0, %v72
  %v74 = vsel %vm68, %v73, %v72
  %vm75 = vcmp.ne.s32.totalorder %v53, 0
  %vm76 = vcmp.ne.s32.totalorder %v60, 0
  %vm77 = vcmp.ne.s32.totalorder %v67, 0
  %vm78 = vcmp.ne.s32.totalorder %v74, 0
  %vm79 = vcmp.lt.s32.totalorder %v53, 0
  %vm80 = vcmp.lt.s32.totalorder %v60, 0
  %vm81 = vcmp.lt.s32.totalorder %v67, 0
  %vm82 = vcmp.lt.s32.totalorder %v74, 0
  %vm83 = vmand %vm79, %vm75
  %vm84 = vmand %vm80, %vm76
  %vm85 = vmand %vm81, %vm77
  %vm86 = vmand %vm82, %vm78
  %v87 = vadd.s32 %v53, 16
  %v88 = vadd.s32 %v60, 16
  %v89 = vadd.s32 %v67, 16
  %v90 = vadd.s32 %v74, 16
  %v91 = vsel %vm83, %v87, %v53
  %v92 = vsel %vm84, %v88, %v60
  %v93 = vsel %vm85, %v89, %v67
  %v94 = vsel %vm86, %v90, %v74
  %v95 = vadd.s32 %v91, 4294967295
  %v96 = vadd.s32 %v92, 4294967295
  %v97 = vadd.s32 %v93, 4294967295
  %v98 = vadd.s32 %v94, 4294967295
  %vm99 = vcmp.ge.s32.totalorder %v95, 0
  %vm100 = vcmp.ge.s32.totalorder %v96, 0
  %vm101 = vcmp.ge.s32.totalorder %v97, 0
  %vm102 = vcmp.ge.s32.totalorder %v98, 0
  %vm103 = vcmp.lt.s32.totalorder %v95, 16
  %vm104 = vcmp.lt.s32.totalorder %v96, 16
  %vm105 = vcmp.lt.s32.totalorder %v97, 16
  %vm106 = vcmp.lt.s32.totalorder %v98, 16
  %vm107 = vmand %vm99, %vm103
  %vm108 = vmand %vm100, %vm104
  %vm109 = vmand %vm101, %vm105
  %vm110 = vmand %vm102, %vm106
  %v111 = vsel %vm107, 1.0, 0.0
  %v112 = vsel %vm108, 1.0, 0.0
  %v113 = vsel %vm109, 1.0, 0.0
  %v114 = vsel %vm110, 1.0, 0.0
  %v115 = vadd.s32 %v91, 1
  %v116 = vadd.s32 %v92, 1
  %v117 = vadd.s32 %v93, 1
  %v118 = vadd.s32 %v94, 1
  %vm119 = vcmp.ge.s32.totalorder %v115, 0
  %vm120 = vcmp.ge.s32.totalorder %v116, 0
  %vm121 = vcmp.ge.s32.totalorder %v117, 0
  %vm122 = vcmp.ge.s32.totalorder %v118, 0
  %vm123 = vcmp.lt.s32.totalorder %v115, 16
  %vm124 = vcmp.lt.s32.totalorder %v116, 16
  %vm125 = vcmp.lt.s32.totalorder %v117, 16
  %vm126 = vcmp.lt.s32.totalorder %v118, 16
  %vm127 = vmand %vm119, %vm123
  %vm128 = vmand %vm120, %vm124
  %vm129 = vmand %vm121, %vm125
  %vm130 = vmand %vm122, %vm126
  %v131 = vsel %vm127, 1.0, 0.0
  %v132 = vsel %vm128, 1.0, 0.0
  %v133 = vsel %vm129, 1.0, 0.0
  %v134 = vsel %vm130, 1.0, 0.0
  %v135 = vmul.f32 %v26, %v111
  %v136 = vmul.f32 %v22, %v112
  %v137 = vmul.f32 %v40, %v113
  %v138 = vmul.f32 %v36, %v114
  %141 = vrot.lane.b32.xlu0 %v26, 127
  %v142 = vpop.permute.xlu0 %141
  %143 = vrot.lane.b32.xlu0 %v22, 127
  %v144 = vpop.permute.xlu0 %143
  %145 = vrot.lane.b32.xlu0 %v27, 127
  %v146 = vpop.permute.xlu0 %145
  %vm147 = vcmask 1039360
  %v148 = vsel %vm147, %v142, %v144
  %v149 = vsel %vm147, %v144, %v146
  %152 = vrot.lane.b32.xlu0 %v40, 127
  %v153 = vpop.permute.xlu0 %152
  %154 = vrot.lane.b32.xlu0 %v36, 127
  %v155 = vpop.permute.xlu0 %154
  %156 = vrot.lane.b32.xlu0 %v41, 127
  %v157 = vpop.permute.xlu0 %156
  %v158 = vsel %vm147, %v153, %v155
  %v159 = vsel %vm147, %v155, %v157
  %160 = vrot.lane.b32.xlu0 %v26, 126
  %v161 = vpop.permute.xlu0 %160
  %162 = vrot.lane.b32.xlu0 %v22, 126
  %v163 = vpop.permute.xlu0 %162
  %164 = vrot.lane.b32.xlu0 %v27, 126
  %v165 = vpop.permute.xlu0 %164
  %vm166 = vcmask 1031168
  %v167 = vsel %vm166, %v161, %v163
  %v168 = vsel %vm166, %v163, %v165
  %171 = vrot.lane.b32.xlu0 %v40, 126
  %v172 = vpop.permute.xlu0 %171
  %173 = vrot.lane.b32.xlu0 %v36, 126
  %v174 = vpop.permute.xlu0 %173
  %175 = vrot.lane.b32.xlu0 %v41, 126
  %v176 = vpop.permute.xlu0 %175
  %v177 = vsel %vm166, %v172, %v174
  %v178 = vsel %vm166, %v174, %v176
  %v181 = vmul.f32 %v167, %v131
  %v182 = vmul.f32 %v168, %v132
  %v183 = vmul.f32 %v177, %v133
  %v184 = vmul.f32 %v178, %v134
  %185 = vrot.lane.b32.xlu0 %v26, 112
  %v186 = vpop.permute.xlu0 %185
  %187 = vrot.lane.b32.xlu0 %v22, 112
  %v188 = vpop.permute.xlu0 %187
  %189 = vrot.lane.b32.xlu0 %v27, 112
  %v190 = vpop.permute.xlu0 %189
  %vm191 = vcmask 916480
  %v192 = vsel %vm191, %v186, %v188
  %v193 = vsel %vm191, %v188, %v190
  %196 = vrot.lane.b32.xlu0 %v40, 112
  %v197 = vpop.permute.xlu0 %196
  %198 = vrot.lane.b32.xlu0 %v36, 112
  %v199 = vpop.permute.xlu0 %198
  %200 = vrot.lane.b32.xlu0 %v41, 112
  %v201 = vpop.permute.xlu0 %200
  %v202 = vsel %vm191, %v197, %v199
  %v203 = vsel %vm191, %v199, %v201
  %v206 = vmul.f32 %v192, %v111
  %v207 = vmul.f32 %v193, %v112
  %v208 = vmul.f32 %v202, %v113
  %v209 = vmul.f32 %v203, %v114
  %210 = vrot.lane.b32.xlu0 %v26, 111
  %v211 = vpop.permute.xlu0 %210
  %212 = vrot.lane.b32.xlu0 %v22, 111
  %v213 = vpop.permute.xlu0 %212
  %214 = vrot.lane.b32.xlu0 %v27, 111
  %v215 = vpop.permute.xlu0 %214
  %vm216 = vcmask 908288
  %v217 = vsel %vm216, %v211, %v213
  %v218 = vsel %vm216, %v213, %v215
  %221 = vrot.lane.b32.xlu0 %v40, 111
  %v222 = vpop.permute.xlu0 %221
  %223 = vrot.lane.b32.xlu0 %v36, 111
  %v224 = vpop.permute.xlu0 %223
  %225 = vrot.lane.b32.xlu0 %v41, 111
  %v226 = vpop.permute.xlu0 %225
  %v227 = vsel %vm216, %v222, %v224
  %v228 = vsel %vm216, %v224, %v226
  %231 = vrot.lane.b32.xlu0 %v26, 110
  %v232 = vpop.permute.xlu0 %231
  %233 = vrot.lane.b32.xlu0 %v22, 110
  %v234 = vpop.permute.xlu0 %233
  %235 = vrot.lane.b32.xlu0 %v27, 110
  %v236 = vpop.permute.xlu0 %235
  %vm237 = vcmask 900096
  %v238 = vsel %vm237, %v232, %v234
  %v239 = vsel %vm237, %v234, %v236
  %242 = vrot.lane.b32.xlu0 %v40, 110
  %v243 = vpop.permute.xlu0 %242
  %244 = vrot.lane.b32.xlu0 %v36, 110
  %v245 = vpop.permute.xlu0 %244
  %246 = vrot.lane.b32.xlu0 %v41, 110
  %v247 = vpop.permute.xlu0 %246
  %v248 = vsel %vm237, %v243, %v245
  %v249 = vsel %vm237, %v245, %v247
  %v252 = vmul.f32 %v238, %v131
  %v253 = vmul.f32 %v239, %v132
  %v254 = vmul.f32 %v248, %v133
  %v255 = vmul.f32 %v249, %v134
  %256 = vrot.lane.b32.xlu0 %v26, 96
  %v257 = vpop.permute.xlu0 %256
  %258 = vrot.lane.b32.xlu0 %v22, 96
  %v259 = vpop.permute.xlu0 %258
  %260 = vrot.lane.b32.xlu0 %v27, 96
  %v261 = vpop.permute.xlu0 %260
  %vm262 = vcmask 785408
  %v263 = vsel %vm262, %v257, %v259
  %v264 = vsel %vm262, %v259, %v261
  %267 = vrot.lane.b32.xlu0 %v40, 96
  %v268 = vpop.permute.xlu0 %267
  %269 = vrot.lane.b32.xlu0 %v36, 96
  %v270 = vpop.permute.xlu0 %269
  %271 = vrot.lane.b32.xlu0 %v41, 96
  %v272 = vpop.permute.xlu0 %271
  %v273 = vsel %vm262, %v268, %v270
  %v274 = vsel %vm262, %v270, %v272
  %v277 = vmul.f32 %v263, %v111
  %v278 = vmul.f32 %v264, %v112
  %v279 = vmul.f32 %v273, %v113
  %v280 = vmul.f32 %v274, %v114
  %281 = vrot.lane.b32.xlu0 %v26, 95
  %v282 = vpop.permute.xlu0 %281
  %283 = vrot.lane.b32.xlu0 %v22, 95
  %v284 = vpop.permute.xlu0 %283
  %285 = vrot.lane.b32.xlu0 %v27, 95
  %v286 = vpop.permute.xlu0 %285
  %vm287 = vcmask 777216
  %v288 = vsel %vm287, %v282, %v284
  %v289 = vsel %vm287, %v284, %v286
  %290 = vrot.lane.b32.xlu0 %v40, 95
  %v291 = vpop.permute.xlu0 %290
  %292 = vrot.lane.b32.xlu0 %v36, 95
  %v293 = vpop.permute.xlu0 %292
  %294 = vrot.lane.b32.xlu0 %v41, 95
  %v295 = vpop.permute.xlu0 %294
  %v296 = vsel %vm287, %v291, %v293
  %v297 = vsel %vm287, %v293, %v295
  %298 = vrot.lane.b32.xlu0 %v26, 94
  %v299 = vpop.permute.xlu0 %298
  %300 = vrot.lane.b32.xlu0 %v22, 94
  %v301 = vpop.permute.xlu0 %300
  %302 = vrot.lane.b32.xlu0 %v27, 94
  %v303 = vpop.permute.xlu0 %302
  %vm304 = vcmask 769024
  %v305 = vsel %vm304, %v299, %v301
  %v306 = vsel %vm304, %v301, %v303
  %309 = vrot.lane.b32.xlu0 %v40, 94
  %v310 = vpop.permute.xlu0 %309
  %311 = vrot.lane.b32.xlu0 %v36, 94
  %v312 = vpop.permute.xlu0 %311
  %313 = vrot.lane.b32.xlu0 %v41, 94
  %v314 = vpop.permute.xlu0 %313
  %v315 = vsel %vm304, %v310, %v312
  %v316 = vsel %vm304, %v312, %v314
  %v319 = vmul.f32 %v305, %v131
  %v320 = vmul.f32 %v306, %v132
  %v321 = vmul.f32 %v315, %v133
  %v322 = vmul.f32 %v316, %v134
  %v323 = vrot.slane %v148, 4
  %v324 = vrot.slane %v149, 4
  %v325 = vrot.slane %v158, 4
  %v326 = vrot.slane %v159, 4
  %v335 = vrot.slane %v206, 4
  %v336 = vrot.slane %v207, 4
  %v337 = vrot.slane %v208, 4
  %v338 = vrot.slane %v209, 4
  %v347 = vrot.slane %v252, 4
  %v348 = vrot.slane %v253, 4
  %v349 = vrot.slane %v254, 4
  %v350 = vrot.slane %v255, 4
  %v355 = vrot.slane %v288, 4
  %v356 = vrot.slane %v289, 4
  %v357 = vrot.slane %v296, 4
  %v358 = vrot.slane %v297, 4
  %vm363 = vcmask 1043456
  %v364 = vsel %vm363, %v135, %v323
  %v365 = vsel %vm363, %v136, %v324
  %v366 = vsel %vm363, %v137, %v325
  %v367 = vsel %vm363, %v138, %v326
  %v368 = vsel %vm363, %v181, %v335
  %v369 = vsel %vm363, %v182, %v336
  %v370 = vsel %vm363, %v183, %v337
  %v371 = vsel %vm363, %v184, %v338
  %v372 = vsel %vm363, %v217, %v347
  %v373 = vsel %vm363, %v218, %v348
  %v374 = vsel %vm363, %v227, %v349
  %v375 = vsel %vm363, %v228, %v350
  %v376 = vsel %vm363, %v277, %v355
  %v377 = vsel %vm363, %v278, %v356
  %v378 = vsel %vm363, %v279, %v357
  %v379 = vsel %vm363, %v280, %v358
  %v380 = vld [vmem:[%s1] sm:$0xff]
  %v381 = vld [vmem:[%s2] sm:$0xff]
  %383 = vset.pattern.permute.xlu0 0
  %384 = vperm.xlu0 %383, %v381
  %v385 = vpop.permute.xlu0 %384
  %vm387 = vcmask 293888
  %v389 = vsel %vm387, %v380, 0
  %v392 = vsel %vm363, %v319, 0
  %v395 = vsel %vm363, %v320, 0
  %v398 = vsel %vm363, %v321, 0
  %v401 = vsel %vm363, %v322, 0
  %403 = vmatprep.subr.mxu0 %v365
  %404 = vmatpush1.msra.mxu0 %v364
  %405 = vmatprep.subr.mxu0 %v369
  %406 = vmatpush1.msra.mxu0 %v368
  %407 = vmatprep.subr.mxu0 %v373
  %408 = vmatpush1.msra.mxu0 %v372
  %409 = vmatprep.subr.mxu0 %v377
  %410 = vmatpush1.msra.mxu0 %v376
  %411 = vmatprep.subr.mxu0 %v395
  %412 = vmatpush1.msra.mxu0 %v392
  %413 = vmatprep.subr.mxu0 0.0
  %414 = vmatpush1.msra.mxu0 0.0
  %415 = vmatprep.subr.mxu0 0.0
  %416 = vmatpush1.msra.mxu0 0.0
  %417 = vmatprep.subr.mxu0 0.0
  %418 = vmatpush1.msra.mxu0 0.0
  %419 = vmatprep.subr.mxu0 0.0
  %420 = vmatpush1.msra.mxu0 0.0
  %421 = vmatprep.subr.mxu0 0.0
  %422 = vmatpush1.msra.mxu0 0.0
  %423 = vmatprep.subr.mxu0 0.0
  %424 = vmatpush1.msra.mxu0 0.0
  %425 = vmatprep.subr.mxu0 0.0
  %426 = vmatpush1.msra.mxu0 0.0
  %427 = vmatprep.subr.mxu0 0.0
  %428 = vmatpush1.msra.mxu0 0.0
  %429 = vmatprep.subr.mxu0 0.0
  %430 = vmatpush1.msra.mxu0 0.0
  %431 = vmatprep.subr.mxu0 0.0
  %432 = vmatpush1.msra.mxu0 0.0
  %433 = vmatprep.subr.mxu0 0.0
  %434 = vmatpush1.msra.mxu0 0.0
  %435 = vmatprep.subr.mxu0 0.0
  %436 = vmatpush1.msra.mxu0 0.0
  %437 = vmatprep.subr.mxu0 0.0
  %438 = vmatpush1.msra.mxu0 0.0
  %439 = vmatprep.subr.mxu0 0.0
  %440 = vmatpush1.msra.mxu0 0.0
  %441 = vmatprep.subr.mxu0 0.0
  %442 = vmatpush1.msra.mxu0 0.0
  %443 = vmatprep.subr.mxu0 0.0
  %444 = vmatpush1.msra.mxu0 0.0
  %445 = vmatprep.subr.mxu0 0.0
  %446 = vmatpush1.msra.mxu0 0.0
  %447 = vmatprep.subr.mxu0 0.0
  %448 = vmatpush1.msra.mxu0 0.0
  %449 = vmatprep.subr.mxu0 0.0
  %450 = vmatpush1.msra.mxu0 0.0
  %451 = vmatprep.subr.mxu0 0.0
  %452 = vmatpush1.msra.mxu0 0.0
  %453 = vmatprep.subr.mxu0 0.0
  %454 = vmatpush1.msra.mxu0 0.0
  %455 = vmatprep.subr.mxu0 0.0
  %456 = vmatpush1.msra.mxu0 0.0
  %457 = vmatprep.subr.mxu0 0.0
  %458 = vmatpush1.msra.mxu0 0.0
  %459 = vmatprep.subr.mxu0 0.0
  %460 = vmatpush1.msra.mxu0 0.0
  %461 = vmatprep.subr.mxu0 0.0
  %462 = vmatpush1.msra.mxu0 0.0
  %463 = vmatprep.subr.mxu0 0.0
  %464 = vmatpush1.msra.mxu0 0.0
  %465 = vmatprep.subr.mxu0 0.0
  %466 = vmatpush1.msra.mxu0 0.0
  %467 = vmatprep.mubr.f32.mxu0 0.0
  %468 = vmatmul.mubr.f32.gmra.mrb[0].mxu0 %v389
  %v469 = vpop.f32.mrb[0].mxu0
  %v470 = vadd.f32 %v385, %v469
  %v471 = vpop.f32.mrb[0].mxu0
  %v472 = vadd.f32 %v385, %v471
  %473 = vdwg.mxu0
  %474 = vmatprep.subr.mxu0 %v367
  %475 = vmatpush1.msra.mxu0 %v366
  %476 = vmatprep.subr.mxu0 %v371
  %477 = vmatpush1.msra.mxu0 %v370
  %478 = vmatprep.subr.mxu0 %v375
  %479 = vmatpush1.msra.mxu0 %v374
  %480 = vmatprep.subr.mxu0 %v379
  %481 = vmatpush1.msra.mxu0 %v378
  %482 = vmatprep.subr.mxu0 %v401
  %483 = vmatpush1.msra.mxu0 %v398
  %484 = vmatprep.subr.mxu0 0.0
  %485 = vmatpush1.msra.mxu0 0.0
  %486 = vmatprep.subr.mxu0 0.0
  %487 = vmatpush1.msra.mxu0 0.0
  %488 = vmatprep.subr.mxu0 0.0
  %489 = vmatpush1.msra.mxu0 0.0
  %490 = vmatprep.subr.mxu0 0.0
  %491 = vmatpush1.msra.mxu0 0.0
  %492 = vmatprep.subr.mxu0 0.0
  %493 = vmatpush1.msra.mxu0 0.0
  %494 = vmatprep.subr.mxu0 0.0
  %495 = vmatpush1.msra.mxu0 0.0
  %496 = vmatprep.subr.mxu0 0.0
  %497 = vmatpush1.msra.mxu0 0.0
  %498 = vmatprep.subr.mxu0 0.0
  %499 = vmatpush1.msra.mxu0 0.0
  %500 = vmatprep.subr.mxu0 0.0
  %501 = vmatpush1.msra.mxu0 0.0
  %502 = vmatprep.subr.mxu0 0.0
  %503 = vmatpush1.msra.mxu0 0.0
  %504 = vmatprep.subr.mxu0 0.0
  %505 = vmatpush1.msra.mxu0 0.0
  %506 = vmatprep.subr.mxu0 0.0
  %507 = vmatpush1.msra.mxu0 0.0
  %508 = vmatprep.subr.mxu0 0.0
  %509 = vmatpush1.msra.mxu0 0.0
  %510 = vmatprep.subr.mxu0 0.0
  %511 = vmatpush1.msra.mxu0 0.0
  %512 = vmatprep.subr.mxu0 0.0
  %513 = vmatpush1.msra.mxu0 0.0
  %514 = vmatprep.subr.mxu0 0.0
  %515 = vmatpush1.msra.mxu0 0.0
  %516 = vmatprep.subr.mxu0 0.0
  %517 = vmatpush1.msra.mxu0 0.0
  %518 = vmatprep.subr.mxu0 0.0
  %519 = vmatpush1.msra.mxu0 0.0
  %520 = vmatprep.subr.mxu0 0.0
  %521 = vmatpush1.msra.mxu0 0.0
  %522 = vmatprep.subr.mxu0 0.0
  %523 = vmatpush1.msra.mxu0 0.0
  %524 = vmatprep.subr.mxu0 0.0
  %525 = vmatpush1.msra.mxu0 0.0
  %526 = vmatprep.subr.mxu0 0.0
  %527 = vmatpush1.msra.mxu0 0.0
  %528 = vmatprep.subr.mxu0 0.0
  %529 = vmatpush1.msra.mxu0 0.0
  %530 = vmatprep.subr.mxu0 0.0
  %531 = vmatpush1.msra.mxu0 0.0
  %532 = vmatprep.subr.mxu0 0.0
  %533 = vmatpush1.msra.mxu0 0.0
  %534 = vmatprep.subr.mxu0 0.0
  %535 = vmatpush1.msra.mxu0 0.0
  %536 = vmatprep.subr.mxu0 0.0
  %537 = vmatpush1.msra.mxu0 0.0
  %538 = vmatprep.mubr.f32.mxu0 0.0
  %539 = vmatmul.mubr.f32.gmra.mrb[0].mxu0 %v389
  %v540 = vpop.f32.mrb[0].mxu0
  %v541 = vadd.f32 %v385, %v540
  %v542 = vpop.f32.mrb[0].mxu0
  %v543 = vadd.f32 %v385, %v542
  %544 = vdwg.mxu0
  %v545 = vmax.f32 %v470, 0.0
  %v546 = vmax.f32 %v472, 0.0
  %v547 = vmax.f32 %v541, 0.0
  %v548 = vmax.f32 %v543, 0.0
  %549 = vst [vmem:[%s3] sm:$0xff] %v545
  %550 = vst [vmem:[%s3 + $0x8] sm:$0xff] %v546
  %s551 = scalar_lea.vmem %s3, 16
  %552 = vst [vmem:[%s551] sm:$0xff] %v547
  %553 = vst [vmem:[%s551 + $0x8] sm:$0xff] %v548
  // Predicated region
  $region14: #{basic_conv.1} parent=0 // pred_check
    _
  $region15: #{basic_conv.1} parent=0 // pred_check_branch
    %555 = sbr.rel (0) target = $region17
  $region16: #{basic_conv.1} parent=0 // pred_region
    _
  $region17: #{basic_conv.1} parent=0 // pred_fallthru
    _
  // Predicated region
  $region18: #{basic_conv.1} parent=0 // pred_check
    _
  $region19: #{basic_conv.1} parent=0 // pred_check_branch
    %557 = sbr.rel (0) target = $region21
  $region20: #{basic_conv.1} parent=0 // pred_region
    _
  $region21: #{basic_conv.1} parent=0 // pred_fallthru
    _

</llo_original>
